<compile_context>
chip_gen: v7x
topology: tpu7x:2x2x1
jax: 0.10.0
libtpu: 0.0.40
codegen_flags: <defaults>
</compile_context>

<pallas_src>
import functools

import jax
import jax.numpy as jnp
from jax.experimental import pallas as pl
from jax.experimental.pallas import tpu as pltpu

_LANE = 128
_SUBLANE = 8
_BF16_SUBLANE = 16  # bf16 packs two rows per sublane


def _round_up(x, m):
    return (x + m - 1) // m * m


def _pad2d(a, rows, cols):
    r, c = a.shape
    if r == rows and c == cols:
        return a
    return jnp.pad(a, ((0, rows - r), (0, cols - c)))


# ---------------------------------------------------------------------------
# Fused kernel: x -> (Linear + LeakyReLU)*L -> Linear(concatenated heads)
# Weights/biases are whole resident VMEM blocks; x/out are tiled over batch.
# Intermediate activations never leave the kernel.
# ---------------------------------------------------------------------------
def _fused_mlp_kernel(*refs, num_encoding, leaky_slope):
    x_ref = refs[0]
    out_ref = refs[-1]
    slope = jnp.float32(leaky_slope)

    h = x_ref[...]  # bf16 (tm, Kin)
    idx = 1
    for _ in range(num_encoding):
        w_ref, b_ref = refs[idx], refs[idx + 1]
        idx += 2
        y = jnp.dot(h, w_ref[...], preferred_element_type=jnp.float32)  # MXU, f32 acc
        y = y + b_ref[...]                      # (1, N) broadcasts, f32
        y = jnp.maximum(y, slope * y)           # LeakyReLU, f32 (mul + max)
        h = y.astype(jnp.bfloat16)              # next MXU operand

    wh_ref, bh_ref = refs[idx], refs[idx + 1]   # concatenated heads
    out = jnp.dot(h, wh_ref[...], preferred_element_type=jnp.float32)
    out_ref[...] = (out + bh_ref[...]).astype(out_ref.dtype)


# ---------------------------------------------------------------------------
# Parameters
# ---------------------------------------------------------------------------
def init_multi_mlp_params(key, input_size, layer_sizes, output_sizes):
    """Logical (unpadded) f32 params. Weights (in, out); biases (1, out)."""
    sizes = [input_size] + list(layer_sizes)
    params = {"encoding": [], "heads": []}
    for i in range(len(sizes) - 1):
        key, kw, kb = jax.random.split(key, 3)
        bound = 1.0 / jnp.sqrt(sizes[i])
        w = jax.random.uniform(kw, (sizes[i], sizes[i + 1]), jnp.float32, -bound, bound)
        b = jax.random.uniform(kb, (1, sizes[i + 1]), jnp.float32, -bound, bound)
        params["encoding"].append((w, b))
    for out in output_sizes:
        key, kw, kb = jax.random.split(key, 3)
        bound = 1.0 / jnp.sqrt(sizes[-1])
        w = jax.random.uniform(kw, (sizes[-1], out), jnp.float32, -bound, bound)
        b = jax.random.uniform(kb, (1, out), jnp.float32, -bound, bound)
        params["heads"].append((w, b))
    return params


def pack_multi_mlp_params(params):
    """bf16 weights; N padded to 128 lanes; first K padded only to 16 (bf16
    sublane).  Head weights/biases concatenated along N.  Zero padding is
    exact: padded columns stay zero through bias + LeakyReLU and padded rows
    contribute nothing to the contraction."""
    if params["encoding"]:
        k_in = int(params["encoding"][0][0].shape[0])
    else:
        k_in = int(params["heads"][0][0].shape[0])
    pk_in = _round_up(k_in, _BF16_SUBLANE)

    enc = []
    prev_pn = pk_in
    for w, b in params["encoding"]:
        _, n = w.shape
        pn = _round_up(n, _LANE)
        enc.append((_pad2d(w, prev_pn, pn).astype(jnp.bfloat16),
                    _pad2d(b, 1, pn)))                       # bias stays f32
        prev_pn = pn

    head_ws = [w for w, _ in params["heads"]]
    head_bs = [b for _, b in params["heads"]]
    head_sizes = tuple(int(w.shape[1]) for w in head_ws)
    n_total = sum(head_sizes)
    pn = _round_up(n_total, _LANE)
    wh = _pad2d(jnp.concatenate(head_ws, axis=1), prev_pn, pn).astype(jnp.bfloat16)
    bh = _pad2d(jnp.concatenate(head_bs, axis=1), 1, pn)

    return {"enc": enc, "head_w": wh, "head_b": bh,
            "head_sizes": head_sizes, "k_in": k_in, "pk_in": pk_in}


# ---------------------------------------------------------------------------
# Forward: single pallas_call for the whole MLP + all heads
# ---------------------------------------------------------------------------
def multi_mlp_forward(packed, x, *, leaky_slope=0.01):
    """Equivalent of MultiMlp.forward: returns a list of head outputs."""
    M, K = x.shape
    enc = packed["enc"]
    wh, bh = packed["head_w"], packed["head_b"]
    head_sizes = packed["head_sizes"]
    pk_in = packed["pk_in"]
    pN = wh.shape[1]

    # Input in bf16 (halves x DMA bytes); pad only if sublane-misaligned.
    xb = x.astype(jnp.bfloat16)
    rows = M
    if K != pk_in or (M % _SUBLANE) != 0:
        rows = _round_up(M, _SUBLANE)
        xb = _pad2d(xb, rows, pk_in)

    # Batch tiling: >=2 tiles when possible (megacore sharding on v7x),
    # 512-row tiles for large batches; grid via cdiv (no padding to tile mult).
    if rows <= _SUBLANE:
        tm = rows
    elif rows <= 1024:
        tm = _round_up(pl.cdiv(rows, 2), _SUBLANE)
    else:
        tm = 512
    grid_m = pl.cdiv(rows, tm)

    const_map = lambda i: (0, 0)

    def _param_spec(a):
        # Grid-invariant: single-buffered, nothing to pipeline.
        return pl.BlockSpec(a.shape, const_map, pipeline_mode=pl.Buffered(1))

    flat_inputs = [xb]
    in_specs = [pl.BlockSpec((tm, pk_in), lambda i: (i, 0))]
    for w, b in enc:
        flat_inputs += [w, b]
        in_specs += [_param_spec(w), _param_spec(b)]
    flat_inputs += [wh, bh]
    in_specs += [_param_spec(wh), _param_spec(bh)]
    out_spec = pl.BlockSpec((tm, pN), lambda i: (i, 0))

    # VMEM budget: params resident once (single-buffered) + double-buffered
    # x/out tiles + slack; cap with headroom under physical VMEM.
    param_bytes = sum(int(a.size) * a.dtype.itemsize for a in flat_inputs[1:])
    tile_bytes = tm * pk_in * 2 + tm * pN * 4
    try:
        vmem_cap = int(pltpu.get_tpu_info().vmem_capacity_bytes)
    except Exception:
        vmem_cap = 64 << 20
    vmem_limit = int(min(vmem_cap - (16 << 20),
                         max(8 << 20, param_bytes + 2 * tile_bytes + (2 << 20))))

    # Advisory cost estimate for XLA's scheduler.
    flops = 2 * rows * sum(int(w.shape[0]) * int(w.shape[1]) for w, _ in enc)
    flops += 2 * rows * int(wh.shape[0]) * int(wh.shape[1])
    bytes_accessed = int(rows * pk_in * 2 + rows * pN * 4 + param_bytes)

    kernel = functools.partial(
        _fused_mlp_kernel, num_encoding=len(enc), leaky_slope=leaky_slope
    )
    out_padded = pl.pallas_call(
        kernel,
        out_shape=jax.ShapeDtypeStruct((rows, pN), jnp.float32),
        grid=(grid_m,),
        in_specs=in_specs,
        out_specs=out_spec,
        compiler_params=pltpu.CompilerParams(
            dimension_semantics=("parallel",),
            vmem_limit_bytes=vmem_limit,
        ),
        cost_estimate=pl.CostEstimate(
            flops=int(flops), transcendentals=0, bytes_accessed=bytes_accessed
        ),
    )(*flat_inputs)

    # Split concatenated heads back out and drop any padding.
    outputs = []
    off = 0
    for sz in head_sizes:
        outputs.append(out_padded[:M, off:off + sz])
        off += sz
    return outputs


# ---------------------------------------------------------------------------
# Pure-JAX references
# ---------------------------------------------------------------------------
def _reference_forward_f32(params, x, *, leaky_slope=0.01):
    h = x
    for w, b in params["encoding"]:
        y = h @ w + b
        h = jnp.maximum(y, leaky_slope * y)
    return [h @ w + b for w, b in params["heads"]]


def _reference_forward_bf16(params, x, *, leaky_slope=0.01):
    """Same bf16-operand / f32-accumulate recipe the kernel uses."""
    h = x.astype(jnp.bfloat16)
    for w, b in params["encoding"]:
        y = jnp.dot(h, w.astype(jnp.bfloat16),
                    preferred_element_type=jnp.float32) + b
        h = jnp.maximum(y, leaky_slope * y).astype(jnp.bfloat16)
    return [jnp.dot(h, w.astype(jnp.bfloat16),
                    preferred_element_type=jnp.float32) + b
            for w, b in params["heads"]]


if __name__ == "__main__":
    # Small shapes consistent with the module's forward.
    batch = 8
    input_size = 32
    layer_sizes = [64, 64]
    output_sizes = [16, 8]

    key = jax.random.PRNGKey(0)
    key, kx = jax.random.split(key)
    x = jax.random.normal(kx, (batch, input_size), jnp.float32)

    params = init_multi_mlp_params(key, input_size, layer_sizes, output_sizes)
    packed = pack_multi_mlp_params(params)

    outs = multi_mlp_forward(packed, x)
    outs = [jax.block_until_ready(o) for o in outs]

    # Tight check vs a bf16-operand reference (same math recipe as the kernel).
    refs_bf16 = _reference_forward_bf16(params, x)
    # Loose check vs the full-f32 module semantics (bf16 quantization error).
    refs_f32 = _reference_forward_f32(params, x)
    for o, rb, rf, sz in zip(outs, refs_bf16, refs_f32, output_sizes):
        assert o.shape == (batch, sz), (o.shape, (batch, sz))
        assert jnp.allclose(o, rb, atol=1e-3, rtol=1e-3), "mismatch vs bf16 reference"
        assert jnp.allclose(o, rf, atol=5e-2, rtol=5e-2), "mismatch vs f32 reference"

    print("KERNEL_OK")
</pallas_src>

<mosaic_0001>
module attributes {stable_mosaic.version = 11 : i64} {
  func.func @_fused_mlp_kernel(%arg0: i32, %arg1: memref<8x32xbf16, #tpu.memory_space<vmem>>, %arg2: memref<32x128xbf16, #tpu.memory_space<vmem>>, %arg3: memref<1x128xf32, #tpu.memory_space<vmem>>, %arg4: memref<128x128xbf16, #tpu.memory_space<vmem>>, %arg5: memref<1x128xf32, #tpu.memory_space<vmem>>, %arg6: memref<128x128xbf16, #tpu.memory_space<vmem>>, %arg7: memref<1x128xf32, #tpu.memory_space<vmem>>, %arg8: memref<8x128xf32, #tpu.memory_space<vmem>>) attributes {dimension_semantics = [#tpu.dimension_semantics<parallel>], iteration_bounds = array<i64: 1>, scalar_prefetch = 0 : i64, scratch_operands = 0 : i64, tpu.core_type = #tpu.core_type<tc>, window_params = [{transform_indices = @transform_0, window_bounds = array<i64: 8, 32>}, {pipeline_mode = #tpu.pipeline_mode<synchronous>, transform_indices = @transform_1, window_bounds = array<i64: 32, 128>}, {pipeline_mode = #tpu.pipeline_mode<synchronous>, transform_indices = @transform_2, window_bounds = array<i64: 1, 128>}, {pipeline_mode = #tpu.pipeline_mode<synchronous>, transform_indices = @transform_3, window_bounds = array<i64: 128, 128>}, {pipeline_mode = #tpu.pipeline_mode<synchronous>, transform_indices = @transform_4, window_bounds = array<i64: 1, 128>}, {pipeline_mode = #tpu.pipeline_mode<synchronous>, transform_indices = @transform_5, window_bounds = array<i64: 128, 128>}, {pipeline_mode = #tpu.pipeline_mode<synchronous>, transform_indices = @transform_6, window_bounds = array<i64: 1, 128>}, {transform_indices = @transform_7, window_bounds = array<i64: 8, 128>}]} {
    %c0 = arith.constant 0 : index
    %c0_0 = arith.constant 0 : index
    %0 = vector.load %arg1[%c0, %c0_0] : memref<8x32xbf16, #tpu.memory_space<vmem>>, vector<8x32xbf16>
    %c0_1 = arith.constant 0 : index
    %c0_2 = arith.constant 0 : index
    %1 = vector.load %arg2[%c0_1, %c0_2] : memref<32x128xbf16, #tpu.memory_space<vmem>>, vector<32x128xbf16>
    %cst = arith.constant dense<0.000000e+00> : vector<8x128xf32>
    %2 = tpu.matmul %0, %1, %cst {dimension_numbers = #tpu.dot_dimension_numbers<[1], [0], [0], [1], [0, 0, 1, 1], [], []>} : vector<8x32xbf16>, vector<32x128xbf16>, vector<8x128xf32> -> vector<8x128xf32>
    %c0_3 = arith.constant 0 : index
    %c0_4 = arith.constant 0 : index
    %3 = vector.load %arg3[%c0_3, %c0_4] : memref<1x128xf32, #tpu.memory_space<vmem>>, vector<1x128xf32>
    %4 = vector.broadcast %3 : vector<1x128xf32> to vector<8x128xf32>
    %5 = arith.addf %2, %4 : vector<8x128xf32>
    %cst_5 = arith.constant 0.00999999977 : f32
    %6 = vector.broadcast %cst_5 : f32 to vector<8x128xf32>
    %7 = arith.mulf %6, %5 : vector<8x128xf32>
    %8 = arith.maximumf %5, %7 : vector<8x128xf32>
    %9 = arith.truncf %8 : vector<8x128xf32> to vector<8x128xbf16>
    %c0_6 = arith.constant 0 : index
    %c0_7 = arith.constant 0 : index
    %10 = vector.load %arg4[%c0_6, %c0_7] : memref<128x128xbf16, #tpu.memory_space<vmem>>, vector<128x128xbf16>
    %cst_8 = arith.constant dense<0.000000e+00> : vector<8x128xf32>
    %11 = tpu.matmul %9, %10, %cst_8 {dimension_numbers = #tpu.dot_dimension_numbers<[1], [0], [0], [1], [0, 0, 1, 1], [], []>} : vector<8x128xbf16>, vector<128x128xbf16>, vector<8x128xf32> -> vector<8x128xf32>
    %c0_9 = arith.constant 0 : index
    %c0_10 = arith.constant 0 : index
    %12 = vector.load %arg5[%c0_9, %c0_10] : memref<1x128xf32, #tpu.memory_space<vmem>>, vector<1x128xf32>
    %13 = vector.broadcast %12 : vector<1x128xf32> to vector<8x128xf32>
    %14 = arith.addf %11, %13 : vector<8x128xf32>
    %cst_11 = arith.constant 0.00999999977 : f32
    %15 = vector.broadcast %cst_11 : f32 to vector<8x128xf32>
    %16 = arith.mulf %15, %14 : vector<8x128xf32>
    %17 = arith.maximumf %14, %16 : vector<8x128xf32>
    %18 = arith.truncf %17 : vector<8x128xf32> to vector<8x128xbf16>
    %c0_12 = arith.constant 0 : index
    %c0_13 = arith.constant 0 : index
    %19 = vector.load %arg6[%c0_12, %c0_13] : memref<128x128xbf16, #tpu.memory_space<vmem>>, vector<128x128xbf16>
    %cst_14 = arith.constant dense<0.000000e+00> : vector<8x128xf32>
    %20 = tpu.matmul %18, %19, %cst_14 {dimension_numbers = #tpu.dot_dimension_numbers<[1], [0], [0], [1], [0, 0, 1, 1], [], []>} : vector<8x128xbf16>, vector<128x128xbf16>, vector<8x128xf32> -> vector<8x128xf32>
    %c0_15 = arith.constant 0 : index
    %c0_16 = arith.constant 0 : index
    %21 = vector.load %arg7[%c0_15, %c0_16] : memref<1x128xf32, #tpu.memory_space<vmem>>, vector<1x128xf32>
    %22 = vector.broadcast %21 : vector<1x128xf32> to vector<8x128xf32>
    %23 = arith.addf %20, %22 : vector<8x128xf32>
    %c0_17 = arith.constant 0 : index
    %c0_18 = arith.constant 0 : index
    %24 = vector.load %arg8[%c0_17, %c0_18] : memref<8x128xf32, #tpu.memory_space<vmem>>, vector<8x128xf32>
    tpu.vector_store %arg8[%c0_17, %c0_18], %23 {strides = array<i32>} : memref<8x128xf32, #tpu.memory_space<vmem>>, vector<8x128xf32>,
    return
  }
  func.func @transform_0(%arg0: i32) -> (i32, i32) {
    %c0_i32 = arith.constant 0 : i32
    %c0_i32_0 = arith.constant 0 : i32
    return %arg0, %c0_i32 : i32, i32
  }
  func.func @transform_1(%arg0: i32) -> (i32, i32) {
    %c0_i32 = arith.constant 0 : i32
    %c0_i32_0 = arith.constant 0 : i32
    %c0_i32_1 = arith.constant 0 : i32
    return %c0_i32, %c0_i32_0 : i32, i32
  }
  func.func @transform_2(%arg0: i32) -> (i32, i32) {
    %c0_i32 = arith.constant 0 : i32
    %c0_i32_0 = arith.constant 0 : i32
    %c0_i32_1 = arith.constant 0 : i32
    return %c0_i32, %c0_i32_0 : i32, i32
  }
  func.func @transform_3(%arg0: i32) -> (i32, i32) {
    %c0_i32 = arith.constant 0 : i32
    %c0_i32_0 = arith.constant 0 : i32
    %c0_i32_1 = arith.constant 0 : i32
    return %c0_i32, %c0_i32_0 : i32, i32
  }
  func.func @transform_4(%arg0: i32) -> (i32, i32) {
    %c0_i32 = arith.constant 0 : i32
    %c0_i32_0 = arith.constant 0 : i32
    %c0_i32_1 = arith.constant 0 : i32
    return %c0_i32, %c0_i32_0 : i32, i32
  }
  func.func @transform_5(%arg0: i32) -> (i32, i32) {
    %c0_i32 = arith.constant 0 : i32
    %c0_i32_0 = arith.constant 0 : i32
    %c0_i32_1 = arith.constant 0 : i32
    return %c0_i32, %c0_i32_0 : i32, i32
  }
  func.func @transform_6(%arg0: i32) -> (i32, i32) {
    %c0_i32 = arith.constant 0 : i32
    %c0_i32_0 = arith.constant 0 : i32
    %c0_i32_1 = arith.constant 0 : i32
    return %c0_i32, %c0_i32_0 : i32, i32
  }
  func.func @transform_7(%arg0: i32) -> (i32, i32) {
    %c0_i32 = arith.constant 0 : i32
    %c0_i32_0 = arith.constant 0 : i32
    return %arg0, %c0_i32 : i32, i32
  }
}

</mosaic_0001>

<llo_original>
// kernel: tpu_custom_call.1
$region0: #{tpu_custom_call.1}
  #allocation0 [shape = 'u32[]', space=smem, size = 0x4, offset = 0x4, fixed_abs, tag = 'smem constant byte address 0x4 - core index']
  #allocation1 [shape = 'u32[144,128]{1,0:T(1,128)}', space=vmem, size = 0x12000, scoped, tag = 'internal scratch']
  %s0 = inlined_call_operand.hbm [shape: bf16[8,32], index: 0, kind: input, shape index: {}]
  %s1 = inlined_call_operand.hbm [shape: bf16[32,128], index: 1, kind: input, shape index: {}]
  %s2 = inlined_call_operand.vmem [shape: f32[1,128], index: 2, kind: input, shape index: {}]
  %s3 = inlined_call_operand.hbm [shape: bf16[128,128], index: 3, kind: input, shape index: {}]
  %s4 = inlined_call_operand.vmem [shape: f32[1,128], index: 4, kind: input, shape index: {}]
  %s5 = inlined_call_operand.hbm [shape: bf16[128,128], index: 5, kind: input, shape index: {}]
  %s6 = inlined_call_operand.vmem [shape: f32[1,128], index: 6, kind: input, shape index: {}]
  %s7 = inlined_call_operand.hbm [shape: f32[8,128], index: 7, kind: output, shape index: {}]
  %s8 = sld [smem:[#allocation0]]
  $region54: #{tpu_custom_call.1} parent=0
    _
  %s10 = ssub.s32 1, %s8
  %s11 = scalar_select 0, %s10, %s8
  $region1: #{tpu_custom_call.1} parent=0
    #allocation2 [shape = 'u8[2048]{0}', space=vmem, size = 0x800, scoped, tag = 'input window, operand 0, single buffered']
    #allocation3 [shape = 's32[1]{0}', space=sflag, size = 0x4, scoped, tag = 'scoped memory for tpu_custom_call.1']
    #allocation4 [shape = 's32[1]{0}', space=sflag, size = 0x4, scoped, tag = 'scoped memory for tpu_custom_call.1']
    #allocation5 [shape = 'u8[8192]{0}', space=vmem, size = 0x2000, scoped, tag = 'input window, operand 1, single buffered']
    #allocation6 [shape = 's32[1]{0}', space=sflag, size = 0x4, scoped, tag = 'scoped memory for tpu_custom_call.1']
    #allocation7 [shape = 'u8[32768]{0}', space=vmem, size = 0x8000, scoped, tag = 'input window, operand 3, single buffered']
    #allocation8 [shape = 'u8[32768]{0}', space=vmem, size = 0x8000, scoped, tag = 'input window, operand 5, single buffered']
    #allocation9 [shape = 's32[1]{0}', space=sflag, size = 0x4, scoped, tag = 'scoped memory for tpu_custom_call.1']
    #allocation10 [shape = 'u8[4096]{0}', space=vmem, size = 0x1000, scoped, tag = 'output window, operand 0, single buffered']
    %12 = vsyncpa [#allocation3], 0
    %13 = vsyncpa [#allocation6], 0
    %14 = vsyncpa [#allocation9], 0
    %15 = vsyncpa [#allocation4], 0
    // Predicated region
    $region2: #{tpu_custom_call.1} parent=1 // pred_check
      _
    $region3: #{tpu_custom_call.1} parent=1 // pred_check_branch
      %17 = sbr.rel (0) target = $region5
    $region4: #{tpu_custom_call.1} parent=1 // pred_region
      %s19 = ssub.s32 64, 64
      %20 = vsyncadd [#allocation3], %s19
      %s22 = sshll.u32 [#allocation2], 4
      %s23 = int_to_ptr.vmem [resolvable:$true] %s22
      %25 = dma.hbm_to_vmem [thread:$0]  %s0, 64, %s23, [#allocation3]
    $region5: #{tpu_custom_call.1} parent=1 // pred_fallthru
      _
    // Predicated region
    $region6: #{tpu_custom_call.1} parent=1 // pred_check
      _
    $region7: #{tpu_custom_call.1} parent=1 // pred_check_branch
      %27 = sbr.rel (0) target = $region9
    $region8: #{tpu_custom_call.1} parent=1 // pred_region
      %s29 = ssub.s32 256, 256
      %30 = vsyncadd [#allocation6], %s29
      %s31 = sshll.u32 [#allocation5], 4
      %s32 = int_to_ptr.vmem [resolvable:$true] %s31
      %37 = dma.hbm_to_vmem [thread:$0]  %s1, 256, %s32, [#allocation6], 64, 64, 4
    $region9: #{tpu_custom_call.1} parent=1 // pred_fallthru
      _
    // Predicated region
    $region10: #{tpu_custom_call.1} parent=1 // pred_check
      _
    $region11: #{tpu_custom_call.1} parent=1 // pred_check_branch
      %39 = sbr.rel (0) target = $region13
    $region12: #{tpu_custom_call.1} parent=1 // pred_region
      _
    $region13: #{tpu_custom_call.1} parent=1 // pred_fallthru
      _
    // Predicated region
    $region14: #{tpu_custom_call.1} parent=1 // pred_check
      _
    $region15: #{tpu_custom_call.1} parent=1 // pred_check_branch
      %41 = sbr.rel (0) target = $region17
    $region16: #{tpu_custom_call.1} parent=1 // pred_region
      %s43 = ssub.s32 1024, 1024
      %44 = vsyncadd [#allocation6], %s43
      %s45 = sshll.u32 [#allocation7], 4
      %s46 = int_to_ptr.vmem [resolvable:$true] %s45
      %51 = dma.hbm_to_vmem [thread:$0]  %s3, 1024, %s46, [#allocation6], 64, 64, 4
    $region17: #{tpu_custom_call.1} parent=1 // pred_fallthru
      _
    // Predicated region
    $region18: #{tpu_custom_call.1} parent=1 // pred_check
      _
    $region19: #{tpu_custom_call.1} parent=1 // pred_check_branch
      %53 = sbr.rel (0) target = $region21
    $region20: #{tpu_custom_call.1} parent=1 // pred_region
      _
    $region21: #{tpu_custom_call.1} parent=1 // pred_fallthru
      _
    // Predicated region
    $region22: #{tpu_custom_call.1} parent=1 // pred_check
      _
    $region23: #{tpu_custom_call.1} parent=1 // pred_check_branch
      %55 = sbr.rel (0) target = $region25
    $region24: #{tpu_custom_call.1} parent=1 // pred_region
      %s57 = ssub.s32 1024, 1024
      %58 = vsyncadd [#allocation9], %s57
      %s59 = sshll.u32 [#allocation8], 4
      %s60 = int_to_ptr.vmem [resolvable:$true] %s59
      %65 = dma.hbm_to_vmem [thread:$0]  %s5, 1024, %s60, [#allocation9], 64, 64, 4
    $region25: #{tpu_custom_call.1} parent=1 // pred_fallthru
      _
    // Predicated region
    $region26: #{tpu_custom_call.1} parent=1 // pred_check
      _
    $region27: #{tpu_custom_call.1} parent=1 // pred_check_branch
      %67 = sbr.rel (0) target = $region29
    $region28: #{tpu_custom_call.1} parent=1 // pred_region
      _
    $region29: #{tpu_custom_call.1} parent=1 // pred_fallthru
      _
    // Predicated region
    $region30: #{tpu_custom_call.1} parent=1 // pred_check
      _
    $region31: #{tpu_custom_call.1} parent=1 // pred_check_branch
      %69 = sbr.rel (0) target = $region33
    $region32: #{tpu_custom_call.1} parent=1 // pred_region
      %70 = dma.done [#allocation3], 64
    $region33: #{tpu_custom_call.1} parent=1 // pred_fallthru
      _
    // Predicated region
    $region34: #{tpu_custom_call.1} parent=1 // pred_check
      _
    $region35: #{tpu_custom_call.1} parent=1 // pred_check_branch
      %72 = sbr.rel (0) target = $region37
    $region36: #{tpu_custom_call.1} parent=1 // pred_region
      %73 = dma.done [#allocation6], 256
    $region37: #{tpu_custom_call.1} parent=1 // pred_fallthru
      _
    // Predicated region
    $region38: #{tpu_custom_call.1} parent=1 // pred_check
      _
    $region39: #{tpu_custom_call.1} parent=1 // pred_check_branch
      %75 = sbr.rel (0) target = $region41
    $region40: #{tpu_custom_call.1} parent=1 // pred_region
      %76 = dma.done [#allocation6], 1024
    $region41: #{tpu_custom_call.1} parent=1 // pred_fallthru
      _
    // Predicated region
    $region42: #{tpu_custom_call.1} parent=1 // pred_check
      _
    $region43: #{tpu_custom_call.1} parent=1 // pred_check_branch
      %78 = sbr.rel (0) target = $region45
    $region44: #{tpu_custom_call.1} parent=1 // pred_region
      %79 = dma.done [#allocation9], 1024
    $region45: #{tpu_custom_call.1} parent=1 // pred_fallthru
      _
    %v81 = vld [vmem:[#allocation2] sm:$0xf]
    %v82 = vld [vmem:[#allocation5] sm:$0xf]
    %v83 = vld [vmem:[#allocation5 + $0x4] sm:$0xf]
    %v84 = vld [vmem:[#allocation5 + $0x8] sm:$0xf]
    %v85 = vld [vmem:[#allocation5 + $0xc] sm:$0xf]
    %v86 = vld [vmem:[%s2] sm:$0x1]
    %v88 = vlaneseq
    %v89 = vshrl.u32 %v88, 7
    %v90 = vsub.s32 0, %v89
    %v91 = vrot.slane %v86, %v90
    %v97 = vunpack.c.l.b16 %v82
    %v98 = vunpack.c.l.b16 %v83
    %v99 = vunpack.c.l.b16 %v84
    %v100 = vunpack.c.l.b16 %v85
    %v101 = vpack.c.b16 %v98, %v97
    %v102 = vpack.c.b16 %v100, %v99
    %vm105 = vcmask 261120
    %v107 = vsel %vm105, %v81, 0
    %109 = vmatprep.subr.bf16.mxu0 0
    %110 = vmatpush1.bf16.msra.mxu0 %v101
    %111 = vmatprep.subr.bf16.mxu0 0
    %112 = vmatpush1.bf16.msra.mxu0 %v102
    %113 = vmatprep.subr.bf16.mxu0 0
    %114 = vmatpush1.bf16.msra.mxu0 0
    %115 = vmatprep.subr.bf16.mxu0 0
    %116 = vmatpush1.bf16.msra.mxu0 0
    %117 = vmatprep.subr.bf16.mxu0 0
    %118 = vmatpush1.bf16.msra.mxu0 0
    %119 = vmatprep.subr.bf16.mxu0 0
    %120 = vmatpush1.bf16.msra.mxu0 0
    %121 = vmatprep.subr.bf16.mxu0 0
    %122 = vmatpush1.bf16.msra.mxu0 0
    %123 = vmatprep.subr.bf16.mxu0 0
    %124 = vmatpush1.bf16.msra.mxu0 0
    %125 = vmatprep.subr.bf16.mxu0 0
    %126 = vmatpush1.bf16.msra.mxu0 0
    %127 = vmatprep.subr.bf16.mxu0 0
    %128 = vmatpush1.bf16.msra.mxu0 0
    %129 = vmatprep.subr.bf16.mxu0 0
    %130 = vmatpush1.bf16.msra.mxu0 0
    %131 = vmatprep.subr.bf16.mxu0 0
    %132 = vmatpush1.bf16.msra.mxu0 0
    %133 = vmatprep.subr.bf16.mxu0 0
    %134 = vmatpush1.bf16.msra.mxu0 0
    %135 = vmatprep.subr.bf16.mxu0 0
    %136 = vmatpush1.bf16.msra.mxu0 0
    %137 = vmatprep.subr.bf16.mxu0 0
    %138 = vmatpush1.bf16.msra.mxu0 0
    %139 = vmatprep.subr.bf16.mxu0 0
    %140 = vmatpush1.bf16.msra.mxu0 0
    %141 = vmatprep.mubr.bf16.mxu0 0
    %142 = vmatmul.mubr.bf16.gmra.mrb[0].mxu0 %v107
    %v143 = vpop.f32.mrb[0].mxu0
    %v144 = vadd.f32 %v91, %v143
    %v145 = vpop.f32.mrb[0].mxu0
    %v146 = vpop.f32.mrb[0].mxu0
    %v147 = vpop.f32.mrb[0].mxu0
    %148 = vdwg.mxu0
    %v149 = vmul.f32 %v144, 0.01
    %v150 = vmax.f32 %v144, %v149
    %v151 = vpack.c.bf16 %v150, %v150
    %v152 = vld [vmem:[#allocation7] sm:$0xf]
    %v153 = vld [vmem:[#allocation7 + $0x4] sm:$0xf]
    %v154 = vld [vmem:[#allocation7 + $0x8] sm:$0xf]
    %v155 = vld [vmem:[#allocation7 + $0xc] sm:$0xf]
    %v156 = vld [vmem:[#allocation7 + $0x10] sm:$0xf]
    %v157 = vld [vmem:[#allocation7 + $0x14] sm:$0xf]
    %v158 = vld [vmem:[#allocation7 + $0x18] sm:$0xf]
    %v159 = vld [vmem:[#allocation7 + $0x1c] sm:$0xf]
    %v160 = vld [vmem:[#allocation7 + $0x20] sm:$0xf]
    %v161 = vld [vmem:[#allocation7 + $0x24] sm:$0xf]
    %v162 = vld [vmem:[#allocation7 + $0x28] sm:$0xf]
    %v163 = vld [vmem:[#allocation7 + $0x2c] sm:$0xf]
    %v164 = vld [vmem:[#allocation7 + $0x30] sm:$0xf]
    %v165 = vld [vmem:[#allocation7 + $0x34] sm:$0xf]
    %v166 = vld [vmem:[#allocation7 + $0x38] sm:$0xf]
    %v167 = vld [vmem:[#allocation7 + $0x3c] sm:$0xf]
    %v168 = vld [vmem:[%s4] sm:$0x1]
    %v170 = vlaneseq
    %v171 = vshrl.u32 %v170, 7
    %v172 = vsub.s32 0, %v171
    %v173 = vrot.slane %v168, %v172
    %v191 = vunpack.c.l.b16 %v152
    %v192 = vunpack.c.l.b16 %v153
    %v193 = vunpack.c.l.b16 %v154
    %v194 = vunpack.c.l.b16 %v155
    %v195 = vunpack.c.l.b16 %v156
    %v196 = vunpack.c.l.b16 %v157
    %v197 = vunpack.c.l.b16 %v158
    %v198 = vunpack.c.l.b16 %v159
    %v199 = vunpack.c.l.b16 %v160
    %v200 = vunpack.c.l.b16 %v161
    %v201 = vunpack.c.l.b16 %v162
    %v202 = vunpack.c.l.b16 %v163
    %v203 = vunpack.c.l.b16 %v164
    %v204 = vunpack.c.l.b16 %v165
    %v205 = vunpack.c.l.b16 %v166
    %v206 = vunpack.c.l.b16 %v167
    %v207 = vpack.c.b16 %v192, %v191
    %v208 = vpack.c.b16 %v194, %v193
    %v209 = vpack.c.b16 %v196, %v195
    %v210 = vpack.c.b16 %v198, %v197
    %v211 = vpack.c.b16 %v200, %v199
    %v212 = vpack.c.b16 %v202, %v201
    %v213 = vpack.c.b16 %v204, %v203
    %v214 = vpack.c.b16 %v206, %v205
    %223 = vmatprep.subr.bf16.mxu0 0
    %224 = vmatpush1.bf16.msra.mxu0 %v207
    %225 = vmatprep.subr.bf16.mxu0 0
    %226 = vmatpush1.bf16.msra.mxu0 %v208
    %227 = vmatprep.subr.bf16.mxu0 0
    %228 = vmatpush1.bf16.msra.mxu0 %v209
    %229 = vmatprep.subr.bf16.mxu0 0
    %230 = vmatpush1.bf16.msra.mxu0 %v210
    %231 = vmatprep.subr.bf16.mxu0 0
    %232 = vmatpush1.bf16.msra.mxu0 %v211
    %233 = vmatprep.subr.bf16.mxu0 0
    %234 = vmatpush1.bf16.msra.mxu0 %v212
    %235 = vmatprep.subr.bf16.mxu0 0
    %236 = vmatpush1.bf16.msra.mxu0 %v213
    %237 = vmatprep.subr.bf16.mxu0 0
    %238 = vmatpush1.bf16.msra.mxu0 %v214
    %239 = vmatprep.subr.bf16.mxu0 0
    %240 = vmatpush1.bf16.msra.mxu0 0
    %241 = vmatprep.subr.bf16.mxu0 0
    %242 = vmatpush1.bf16.msra.mxu0 0
    %243 = vmatprep.subr.bf16.mxu0 0
    %244 = vmatpush1.bf16.msra.mxu0 0
    %245 = vmatprep.subr.bf16.mxu0 0
    %246 = vmatpush1.bf16.msra.mxu0 0
    %247 = vmatprep.subr.bf16.mxu0 0
    %248 = vmatpush1.bf16.msra.mxu0 0
    %249 = vmatprep.subr.bf16.mxu0 0
    %250 = vmatpush1.bf16.msra.mxu0 0
    %251 = vmatprep.subr.bf16.mxu0 0
    %252 = vmatpush1.bf16.msra.mxu0 0
    %253 = vmatprep.subr.bf16.mxu0 0
    %254 = vmatpush1.bf16.msra.mxu0 0
    %255 = vmatprep.mubr.bf16.mxu0 0
    %256 = vmatmul.mubr.bf16.gmra.mrb[0].mxu0 %v151
    %v257 = vpop.f32.mrb[0].mxu0
    %v258 = vadd.f32 %v173, %v257
    %v259 = vpop.f32.mrb[0].mxu0
    %v260 = vpop.f32.mrb[0].mxu0
    %v261 = vpop.f32.mrb[0].mxu0
    %262 = vdwg.mxu0
    %v263 = vmul.f32 %v258, 0.01
    %v264 = vmax.f32 %v258, %v263
    %v265 = vpack.c.bf16 %v264, %v264
    %v266 = vld [vmem:[#allocation8] sm:$0xf]
    %v267 = vld [vmem:[#allocation8 + $0x4] sm:$0xf]
    %v268 = vld [vmem:[#allocation8 + $0x8] sm:$0xf]
    %v269 = vld [vmem:[#allocation8 + $0xc] sm:$0xf]
    %v270 = vld [vmem:[#allocation8 + $0x10] sm:$0xf]
    %v271 = vld [vmem:[#allocation8 + $0x14] sm:$0xf]
    %v272 = vld [vmem:[#allocation8 + $0x18] sm:$0xf]
    %v273 = vld [vmem:[#allocation8 + $0x1c] sm:$0xf]
    %v274 = vld [vmem:[#allocation8 + $0x20] sm:$0xf]
    %v275 = vld [vmem:[#allocation8 + $0x24] sm:$0xf]
    %v276 = vld [vmem:[#allocation8 + $0x28] sm:$0xf]
    %v277 = vld [vmem:[#allocation8 + $0x2c] sm:$0xf]
    %v278 = vld [vmem:[#allocation8 + $0x30] sm:$0xf]
    %v279 = vld [vmem:[#allocation8 + $0x34] sm:$0xf]
    %v280 = vld [vmem:[#allocation8 + $0x38] sm:$0xf]
    %v281 = vld [vmem:[#allocation8 + $0x3c] sm:$0xf]
    %v282 = vld [vmem:[%s6] sm:$0x1]
    %v284 = vlaneseq
    %v285 = vshrl.u32 %v284, 7
    %v286 = vsub.s32 0, %v285
    %v287 = vrot.slane %v282, %v286
    %v305 = vunpack.c.l.b16 %v266
    %v306 = vunpack.c.l.b16 %v267
    %v307 = vunpack.c.l.b16 %v268
    %v308 = vunpack.c.l.b16 %v269
    %v309 = vunpack.c.l.b16 %v270
    %v310 = vunpack.c.l.b16 %v271
    %v311 = vunpack.c.l.b16 %v272
    %v312 = vunpack.c.l.b16 %v273
    %v313 = vunpack.c.l.b16 %v274
    %v314 = vunpack.c.l.b16 %v275
    %v315 = vunpack.c.l.b16 %v276
    %v316 = vunpack.c.l.b16 %v277
    %v317 = vunpack.c.l.b16 %v278
    %v318 = vunpack.c.l.b16 %v279
    %v319 = vunpack.c.l.b16 %v280
    %v320 = vunpack.c.l.b16 %v281
    %v321 = vpack.c.b16 %v306, %v305
    %v322 = vpack.c.b16 %v308, %v307
    %v323 = vpack.c.b16 %v310, %v309
    %v324 = vpack.c.b16 %v312, %v311
    %v325 = vpack.c.b16 %v314, %v313
    %v326 = vpack.c.b16 %v316, %v315
    %v327 = vpack.c.b16 %v318, %v317
    %v328 = vpack.c.b16 %v320, %v319
    %337 = vmatprep.subr.bf16.mxu0 0
    %338 = vmatpush1.bf16.msra.mxu0 %v321
    %339 = vmatprep.subr.bf16.mxu0 0
    %340 = vmatpush1.bf16.msra.mxu0 %v322
    %341 = vmatprep.subr.bf16.mxu0 0
    %342 = vmatpush1.bf16.msra.mxu0 %v323
    %343 = vmatprep.subr.bf16.mxu0 0
    %344 = vmatpush1.bf16.msra.mxu0 %v324
    %345 = vmatprep.subr.bf16.mxu0 0
    %346 = vmatpush1.bf16.msra.mxu0 %v325
    %347 = vmatprep.subr.bf16.mxu0 0
    %348 = vmatpush1.bf16.msra.mxu0 %v326
    %349 = vmatprep.subr.bf16.mxu0 0
    %350 = vmatpush1.bf16.msra.mxu0 %v327
    %351 = vmatprep.subr.bf16.mxu0 0
    %352 = vmatpush1.bf16.msra.mxu0 %v328
    %353 = vmatprep.subr.bf16.mxu0 0
    %354 = vmatpush1.bf16.msra.mxu0 0
    %355 = vmatprep.subr.bf16.mxu0 0
    %356 = vmatpush1.bf16.msra.mxu0 0
    %357 = vmatprep.subr.bf16.mxu0 0
    %358 = vmatpush1.bf16.msra.mxu0 0
    %359 = vmatprep.subr.bf16.mxu0 0
    %360 = vmatpush1.bf16.msra.mxu0 0
    %361 = vmatprep.subr.bf16.mxu0 0
    %362 = vmatpush1.bf16.msra.mxu0 0
    %363 = vmatprep.subr.bf16.mxu0 0
    %364 = vmatpush1.bf16.msra.mxu0 0
    %365 = vmatprep.subr.bf16.mxu0 0
    %366 = vmatpush1.bf16.msra.mxu0 0
    %367 = vmatprep.subr.bf16.mxu0 0
    %368 = vmatpush1.bf16.msra.mxu0 0
    %369 = vmatprep.mubr.bf16.mxu0 0
    %370 = vmatmul.mubr.bf16.gmra.mrb[0].mxu0 %v265
    %v371 = vpop.f32.mrb[0].mxu0
    %v372 = vadd.f32 %v287, %v371
    %v373 = vpop.f32.mrb[0].mxu0
    %v374 = vpop.f32.mrb[0].mxu0
    %v375 = vpop.f32.mrb[0].mxu0
    %376 = vdwg.mxu0
    %377 = vst [vmem:[#allocation10] sm:$0xff] %v372
    // Predicated region
    $region46: #{tpu_custom_call.1} parent=1 // pred_check
      _
    $region47: #{tpu_custom_call.1} parent=1 // pred_check_branch
      %379 = sbr.rel (0) target = $region49
    $region48: #{tpu_custom_call.1} parent=1 // pred_region
      %s381 = ssub.s32 128, 128
      %382 = vsyncadd [#allocation4], %s381
      %s384 = sshll.u32 [#allocation10], 4
      %s385 = int_to_ptr.vmem [resolvable:$true] %s384
      %387 = dma.vmem_to_hbm [thread:$0]  %s385, 128, %s7, [#allocation4]
    $region49: #{tpu_custom_call.1} parent=1 // pred_fallthru
      _
    // Predicated region
    $region50: #{tpu_custom_call.1} parent=1 // pred_check
      _
    $region51: #{tpu_custom_call.1} parent=1 // pred_check_branch
      %389 = sbr.rel (0) target = $region53
    $region52: #{tpu_custom_call.1} parent=1 // pred_region
      %390 = dma.done [#allocation4], 128
    $region53: #{tpu_custom_call.1} parent=1 // pred_fallthru
      _
    %391 = vsyncpa [#allocation3], 1
    %392 = vsyncpa [#allocation6], 1
    %393 = vsyncpa [#allocation9], 1
    %394 = vsyncpa [#allocation4], 1

</llo_original>
